<compile_context>
chip_gen: v7x
topology: tpu7x:2x2x1
jax: 0.10.0
libtpu: 0.0.40
codegen_flags: <defaults>
</compile_context>

<pallas_src>
import functools

import jax
import jax.numpy as jnp
from jax.experimental import pallas as pl
from jax.experimental.pallas import tpu as pltpu

EPS = 1e-5
LANE = 128            # pad every feature dim to the lane width
DEFAULT_TILE_B = 512  # batch tile; shrunk automatically for small B


def _round_up(x, m):
    return (x + m - 1) // m * m


# --------------------------------------------------------------------------- #
# Kernel
# --------------------------------------------------------------------------- #
def _distance_net_kernel(z_ref, w_ref, b_ref, out_ref):
    """One batch tile through 3 (Linear+foldedBN+ReLU) layers + logits + sigmoid.

    z_ref  : (TILE_B, LANE)   bf16, zero-padded input features
    w_ref  : (4, LANE, LANE)  bf16, BN folded into layers 0..2; layer 3 = fc_logits
    b_ref  : (4, LANE)        f32, folded biases (row 3: only col 0 is meaningful)
    out_ref: (TILE_B, LANE)   f32, column 0 holds sigmoid(logits)
    """
    x = z_ref[...]  # bf16 (TILE_B, LANE)
    for layer in range(3):  # static unroll -> LLO scheduler sees all 4 matmuls
        h = jnp.dot(x, w_ref[layer], preferred_element_type=jnp.float32)
        h = h + b_ref[layer:layer + 1, :]
        x = jnp.maximum(h, 0.0).astype(jnp.bfloat16)
    logits = jnp.dot(x, w_ref[3], preferred_element_type=jnp.float32)
    logits = logits + b_ref[3:4, :]
    out_ref[...] = jax.nn.sigmoid(logits)


# --------------------------------------------------------------------------- #
# Host-side parameter preparation: fold BatchNorm, pad to lane width, stack.
# --------------------------------------------------------------------------- #
def fold_and_pad_params(params):
    """params (PyTorch layout, weights pre-transposed to (in, out)):
       [w, b, gamma, beta, running_mean, running_var] x 3 + [wl, bl]
    Returns (w_stack (4,LANE,LANE) bf16, b_stack (4,LANE) f32)."""
    z_dim, h_dim = params[0].shape
    dims_in = [z_dim, h_dim, h_dim]
    w_stack, b_stack = [], []
    for i in range(3):
        w, b, g, be, m, v = params[6 * i:6 * i + 6]
        scale = g * jax.lax.rsqrt(v + EPS)            # (1, h_dim), f32
        w_f = w * scale                               # column-wise scale
        b_f = (b - m) * scale + be                    # (1, h_dim)
        w_pad = jnp.zeros((LANE, LANE), jnp.float32).at[:dims_in[i], :h_dim].set(w_f)
        b_pad = jnp.zeros((LANE,), jnp.float32).at[:h_dim].set(b_f[0])
        w_stack.append(w_pad)
        b_stack.append(b_pad)
    wl, bl = params[18], params[19]
    wl_pad = jnp.zeros((LANE, LANE), jnp.float32).at[:h_dim, :1].set(wl)
    bl_pad = jnp.zeros((LANE,), jnp.float32).at[:1].set(bl[0])
    w_stack.append(wl_pad)
    b_stack.append(bl_pad)
    return jnp.stack(w_stack).astype(jnp.bfloat16), jnp.stack(b_stack)


def pad_input(z, b_pad):
    B, z_dim = z.shape
    return jnp.zeros((b_pad, LANE), jnp.bfloat16).at[:B, :z_dim].set(
        z.astype(jnp.bfloat16))


# --------------------------------------------------------------------------- #
# Wrapper
# --------------------------------------------------------------------------- #
@functools.partial(jax.jit, static_argnames=("tile_b",))
def distance_net_forward(z, params, *, tile_b=DEFAULT_TILE_B):
    """z: (B, z_dim) f32; params: flat list as produced by make_params."""
    B, z_dim = z.shape
    h_dim = params[0].shape[1]
    assert z_dim <= LANE and h_dim <= LANE  # TODO(synk): tile feature dim if h_dim > 128

    w_stack, b_stack = fold_and_pad_params(params)

    # Batch tiling: tile_b multiple of 8, B padded up to a multiple of tile_b.
    tile_b = max(8, min(tile_b, _round_up(B, 8)))
    b_pad = _round_up(B, tile_b)
    z_pad = pad_input(z, b_pad)
    n_tiles = b_pad // tile_b

    out_padded = pl.pallas_call(
        _distance_net_kernel,
        out_shape=jax.ShapeDtypeStruct((b_pad, LANE), jnp.float32),
        grid_spec=pltpu.PrefetchScalarGridSpec(
            num_scalar_prefetch=0,
            grid=(n_tiles,),
            in_specs=[
                pl.BlockSpec((tile_b, LANE), lambda i: (i, 0)),      # streamed z tile
                pl.BlockSpec((4, LANE, LANE), lambda i: (0, 0, 0)),  # resident weights
                pl.BlockSpec((4, LANE), lambda i: (0, 0)),           # resident biases
            ],
            out_specs=pl.BlockSpec((tile_b, LANE), lambda i: (i, 0)),
        ),
        compiler_params=pltpu.CompilerParams(
            dimension_semantics=("parallel",),  # v7x megacore; no-op on 1-TC chips
        ),
    )(z_pad, w_stack, b_stack)

    return out_padded[:B, :1]


# --------------------------------------------------------------------------- #
# Deterministic synthetic parameters (PyTorch DistanceNet layout, transposed W)
# --------------------------------------------------------------------------- #
def make_params(key, z_dim, h_dim):
    dims_in = [z_dim, h_dim, h_dim]
    params = []
    for i in range(3):
        k_w, k_b, k_g, k_be, k_m, k_v, key = jax.random.split(key, 7)
        fan_in = dims_in[i]
        w = jax.random.uniform(k_w, (fan_in, h_dim), jnp.float32,
                               minval=-1.0, maxval=1.0) / jnp.sqrt(fan_in)
        b = jax.random.uniform(k_b, (1, h_dim), jnp.float32,
                               minval=-1.0, maxval=1.0) / jnp.sqrt(fan_in)
        gamma = 1.0 + 0.1 * jax.random.normal(k_g, (1, h_dim), jnp.float32)
        beta = 0.1 * jax.random.normal(k_be, (1, h_dim), jnp.float32)
        r_mean = 0.1 * jax.random.normal(k_m, (1, h_dim), jnp.float32)
        r_var = jnp.abs(1.0 + 0.1 * jax.random.normal(k_v, (1, h_dim), jnp.float32))
        params += [w, b, gamma, beta, r_mean, r_var]
    k_w, k_b, _ = jax.random.split(key, 3)
    wl = jax.random.uniform(k_w, (h_dim, 1), jnp.float32,
                            minval=-1.0, maxval=1.0) / jnp.sqrt(h_dim)
    bl = jax.random.uniform(k_b, (1, 1), jnp.float32,
                            minval=-1.0, maxval=1.0) / jnp.sqrt(h_dim)
    params += [wl, bl]
    return params


# --------------------------------------------------------------------------- #
# References
# --------------------------------------------------------------------------- #
def reference_forward_f32(z, params):
    """Original (un-folded, f32) DistanceNet math."""
    x = z
    for i in range(3):
        w, b, g, be, m, v = params[6 * i:6 * i + 6]
        h = x @ w + b
        h = (h - m) * jax.lax.rsqrt(v + EPS) * g + be
        x = jnp.maximum(h, 0.0)
    wl, bl = params[18], params[19]
    return jax.nn.sigmoid(x @ wl + bl)


def reference_forward_folded_bf16(z_pad, w_stack, b_stack):
    """Same folded / bf16-MXU path as the kernel, in plain JAX."""
    x = z_pad
    for i in range(3):
        h = jnp.dot(x, w_stack[i], preferred_element_type=jnp.float32) + b_stack[i][None, :]
        x = jnp.maximum(h, 0.0).astype(jnp.bfloat16)
    logits = jnp.dot(x, w_stack[3], preferred_element_type=jnp.float32) + b_stack[3][None, :]
    return jax.nn.sigmoid(logits)


if __name__ == "__main__":
    B, z_dim, h_dim = 16, 8, 32
    key = jax.random.PRNGKey(0)
    k_z, k_p = jax.random.split(key)
    z = jax.random.normal(k_z, (B, z_dim), jnp.float32)
    params = make_params(k_p, z_dim, h_dim)

    out = distance_net_forward(z, params)
    out = jax.block_until_ready(out)
    assert out.shape == (B, 1)

    # Same-path (folded, bf16 MXU) reference: tight tolerance.
    w_stack, b_stack = fold_and_pad_params(params)
    b_pad = _round_up(B, max(8, min(DEFAULT_TILE_B, _round_up(B, 8))))
    ref_folded = reference_forward_folded_bf16(pad_input(z, b_pad), w_stack, b_stack)[:B, :1]
    assert jnp.allclose(out, ref_folded, atol=5e-3, rtol=5e-3), (out, ref_folded)

    # Original f32 DistanceNet semantics: loose tolerance (bf16 MXU operands).
    ref_f32 = reference_forward_f32(z, params)
    assert jnp.allclose(out, ref_f32, atol=5e-2, rtol=5e-2), (out, ref_f32)

    print("KERNEL_OK")
</pallas_src>

<mosaic_0001>
module attributes {stable_mosaic.version = 11 : i64} {
  func.func @_distance_net_kernel(%arg0: i32, %arg1: memref<16x128xbf16, #tpu.memory_space<vmem>>, %arg2: memref<4x128x128xbf16, #tpu.memory_space<vmem>>, %arg3: memref<4x128xf32, #tpu.memory_space<vmem>>, %arg4: memref<16x128xf32, #tpu.memory_space<vmem>>) attributes {dimension_semantics = [#tpu.dimension_semantics<parallel>], iteration_bounds = array<i64: 1>, scalar_prefetch = 0 : i64, scratch_operands = 0 : i64, tpu.core_type = #tpu.core_type<tc>, window_params = [{transform_indices = @transform_0, window_bounds = array<i64: 16, 128>}, {pipeline_mode = #tpu.pipeline_mode<synchronous>, transform_indices = @transform_1, window_bounds = array<i64: 4, 128, 128>}, {pipeline_mode = #tpu.pipeline_mode<synchronous>, transform_indices = @transform_2, window_bounds = array<i64: 4, 128>}, {transform_indices = @transform_3, window_bounds = array<i64: 16, 128>}]} {
    %c0 = arith.constant 0 : index
    %c0_0 = arith.constant 0 : index
    %0 = vector.load %arg1[%c0, %c0_0] : memref<16x128xbf16, #tpu.memory_space<vmem>>, vector<16x128xbf16>
    %c0_1 = arith.constant 0 : index
    %c0_2 = arith.constant 0 : index
    %c0_3 = arith.constant 0 : index
    %1 = vector.load %arg2[%c0_1, %c0_2, %c0_3] : memref<4x128x128xbf16, #tpu.memory_space<vmem>>, vector<1x128x128xbf16>
    %2 = vector.shape_cast %1 : vector<1x128x128xbf16> to vector<128x128xbf16>
    %cst = arith.constant dense<0.000000e+00> : vector<16x128xf32>
    %3 = tpu.matmul %0, %2, %cst {dimension_numbers = #tpu.dot_dimension_numbers<[1], [0], [0], [1], [0, 0, 1, 1], [], []>} : vector<16x128xbf16>, vector<128x128xbf16>, vector<16x128xf32> -> vector<16x128xf32>
    %c0_4 = arith.constant 0 : index
    %c0_5 = arith.constant 0 : index
    %4 = vector.load %arg3[%c0_4, %c0_5] : memref<4x128xf32, #tpu.memory_space<vmem>>, vector<1x128xf32>
    %5 = vector.broadcast %4 : vector<1x128xf32> to vector<16x128xf32>
    %6 = arith.addf %3, %5 : vector<16x128xf32>
    %cst_6 = arith.constant 0.000000e+00 : f32
    %7 = vector.broadcast %cst_6 : f32 to vector<16x128xf32>
    %8 = arith.maximumf %6, %7 : vector<16x128xf32>
    %9 = arith.truncf %8 : vector<16x128xf32> to vector<16x128xbf16>
    %c1 = arith.constant 1 : index
    %c0_7 = arith.constant 0 : index
    %c0_8 = arith.constant 0 : index
    %10 = vector.load %arg2[%c1, %c0_7, %c0_8] : memref<4x128x128xbf16, #tpu.memory_space<vmem>>, vector<1x128x128xbf16>
    %11 = vector.shape_cast %10 : vector<1x128x128xbf16> to vector<128x128xbf16>
    %cst_9 = arith.constant dense<0.000000e+00> : vector<16x128xf32>
    %12 = tpu.matmul %9, %11, %cst_9 {dimension_numbers = #tpu.dot_dimension_numbers<[1], [0], [0], [1], [0, 0, 1, 1], [], []>} : vector<16x128xbf16>, vector<128x128xbf16>, vector<16x128xf32> -> vector<16x128xf32>
    %c1_10 = arith.constant 1 : index
    %c0_11 = arith.constant 0 : index
    %13 = vector.load %arg3[%c1_10, %c0_11] : memref<4x128xf32, #tpu.memory_space<vmem>>, vector<1x128xf32>
    %14 = vector.broadcast %13 : vector<1x128xf32> to vector<16x128xf32>
    %15 = arith.addf %12, %14 : vector<16x128xf32>
    %cst_12 = arith.constant 0.000000e+00 : f32
    %16 = vector.broadcast %cst_12 : f32 to vector<16x128xf32>
    %17 = arith.maximumf %15, %16 : vector<16x128xf32>
    %18 = arith.truncf %17 : vector<16x128xf32> to vector<16x128xbf16>
    %c2 = arith.constant 2 : index
    %c0_13 = arith.constant 0 : index
    %c0_14 = arith.constant 0 : index
    %19 = vector.load %arg2[%c2, %c0_13, %c0_14] : memref<4x128x128xbf16, #tpu.memory_space<vmem>>, vector<1x128x128xbf16>
    %20 = vector.shape_cast %19 : vector<1x128x128xbf16> to vector<128x128xbf16>
    %cst_15 = arith.constant dense<0.000000e+00> : vector<16x128xf32>
    %21 = tpu.matmul %18, %20, %cst_15 {dimension_numbers = #tpu.dot_dimension_numbers<[1], [0], [0], [1], [0, 0, 1, 1], [], []>} : vector<16x128xbf16>, vector<128x128xbf16>, vector<16x128xf32> -> vector<16x128xf32>
    %c2_16 = arith.constant 2 : index
    %c0_17 = arith.constant 0 : index
    %22 = vector.load %arg3[%c2_16, %c0_17] : memref<4x128xf32, #tpu.memory_space<vmem>>, vector<1x128xf32>
    %23 = vector.broadcast %22 : vector<1x128xf32> to vector<16x128xf32>
    %24 = arith.addf %21, %23 : vector<16x128xf32>
    %cst_18 = arith.constant 0.000000e+00 : f32
    %25 = vector.broadcast %cst_18 : f32 to vector<16x128xf32>
    %26 = arith.maximumf %24, %25 : vector<16x128xf32>
    %27 = arith.truncf %26 : vector<16x128xf32> to vector<16x128xbf16>
    %c3 = arith.constant 3 : index
    %c0_19 = arith.constant 0 : index
    %c0_20 = arith.constant 0 : index
    %28 = vector.load %arg2[%c3, %c0_19, %c0_20] : memref<4x128x128xbf16, #tpu.memory_space<vmem>>, vector<1x128x128xbf16>
    %29 = vector.shape_cast %28 : vector<1x128x128xbf16> to vector<128x128xbf16>
    %cst_21 = arith.constant dense<0.000000e+00> : vector<16x128xf32>
    %30 = tpu.matmul %27, %29, %cst_21 {dimension_numbers = #tpu.dot_dimension_numbers<[1], [0], [0], [1], [0, 0, 1, 1], [], []>} : vector<16x128xbf16>, vector<128x128xbf16>, vector<16x128xf32> -> vector<16x128xf32>
    %c3_22 = arith.constant 3 : index
    %c0_23 = arith.constant 0 : index
    %31 = vector.load %arg3[%c3_22, %c0_23] : memref<4x128xf32, #tpu.memory_space<vmem>>, vector<1x128xf32>
    %32 = vector.broadcast %31 : vector<1x128xf32> to vector<16x128xf32>
    %33 = arith.addf %30, %32 : vector<16x128xf32>
    %34 = arith.negf %33 : vector<16x128xf32>
    %35 = math.exp %34 : vector<16x128xf32>
    %cst_24 = arith.constant 1.000000e+00 : f32
    %36 = vector.broadcast %cst_24 : f32 to vector<16x128xf32>
    %37 = arith.addf %36, %35 : vector<16x128xf32>
    %38 = arith.divf %36, %37 : vector<16x128xf32>
    %c0_25 = arith.constant 0 : index
    %c0_26 = arith.constant 0 : index
    %39 = vector.load %arg4[%c0_25, %c0_26] : memref<16x128xf32, #tpu.memory_space<vmem>>, vector<16x128xf32>
    tpu.vector_store %arg4[%c0_25, %c0_26], %38 {strides = array<i32>} : memref<16x128xf32, #tpu.memory_space<vmem>>, vector<16x128xf32>,
    return
  }
  func.func @transform_0(%arg0: i32) -> (i32, i32) {
    %c0_i32 = arith.constant 0 : i32
    %c0_i32_0 = arith.constant 0 : i32
    return %arg0, %c0_i32 : i32, i32
  }
  func.func @transform_1(%arg0: i32) -> (i32, i32, i32) {
    %c0_i32 = arith.constant 0 : i32
    %c0_i32_0 = arith.constant 0 : i32
    %c0_i32_1 = arith.constant 0 : i32
    %c0_i32_2 = arith.constant 0 : i32
    return %c0_i32, %c0_i32_0, %c0_i32_1 : i32, i32, i32
  }
  func.func @transform_2(%arg0: i32) -> (i32, i32) {
    %c0_i32 = arith.constant 0 : i32
    %c0_i32_0 = arith.constant 0 : i32
    %c0_i32_1 = arith.constant 0 : i32
    return %c0_i32, %c0_i32_0 : i32, i32
  }
  func.func @transform_3(%arg0: i32) -> (i32, i32) {
    %c0_i32 = arith.constant 0 : i32
    %c0_i32_0 = arith.constant 0 : i32
    return %arg0, %c0_i32 : i32, i32
  }
}

</mosaic_0001>

<llo_original>
// kernel: distance_net_forward.1
$region0: #{distance_net_forward.1}
  #allocation0 [shape = 'u32[]', space=smem, size = 0x4, offset = 0x4, fixed_abs, tag = 'smem constant byte address 0x4 - core index']
  #allocation1 [shape = 'u32[144,128]{1,0:T(1,128)}', space=vmem, size = 0x12000, scoped, tag = 'internal scratch']
  %s0 = inlined_call_operand.vmem [shape: bf16[16,128], index: 0, kind: input, shape index: {}]
  %s1 = inlined_call_operand.vmem [shape: bf16[4,128,128], index: 1, kind: input, shape index: {}]
  %s2 = inlined_call_operand.vmem [shape: f32[4,128], index: 2, kind: input, shape index: {}]
  %s3 = inlined_call_operand.vmem [shape: f32[16,128], index: 3, kind: output, shape index: {}]
  %s4 = sld [smem:[#allocation0]]
  $region22: #{distance_net_forward.1} parent=0
    _
  %s6 = ssub.s32 1, %s4
  %s7 = scalar_select 0, %s6, %s4
  // Predicated region
  $region2: #{distance_net_forward.1} parent=0 // pred_check
    _
  $region3: #{distance_net_forward.1} parent=0 // pred_check_branch
    %9 = sbr.rel (0) target = $region5
  $region4: #{distance_net_forward.1} parent=0 // pred_region
    _
  $region5: #{distance_net_forward.1} parent=0 // pred_fallthru
    _
  // Predicated region
  $region6: #{distance_net_forward.1} parent=0 // pred_check
    _
  $region7: #{distance_net_forward.1} parent=0 // pred_check_branch
    %11 = sbr.rel (0) target = $region9
  $region8: #{distance_net_forward.1} parent=0 // pred_region
    _
  $region9: #{distance_net_forward.1} parent=0 // pred_fallthru
    _
  // Predicated region
  $region10: #{distance_net_forward.1} parent=0 // pred_check
    _
  $region11: #{distance_net_forward.1} parent=0 // pred_check_branch
    %13 = sbr.rel (0) target = $region13
  $region12: #{distance_net_forward.1} parent=0 // pred_region
    _
  $region13: #{distance_net_forward.1} parent=0 // pred_fallthru
    _
  %v15 = vld [vmem:[%s0] sm:$0xf]
  %v16 = vld [vmem:[%s0 + $0x4] sm:$0xf]
  %v17 = vld [vmem:[%s1] sm:$0xf]
  %v18 = vld [vmem:[%s1 + $0x4] sm:$0xf]
  %v19 = vld [vmem:[%s1 + $0x8] sm:$0xf]
  %v20 = vld [vmem:[%s1 + $0xc] sm:$0xf]
  %v21 = vld [vmem:[%s1 + $0x10] sm:$0xf]
  %v22 = vld [vmem:[%s1 + $0x14] sm:$0xf]
  %v23 = vld [vmem:[%s1 + $0x18] sm:$0xf]
  %v24 = vld [vmem:[%s1 + $0x1c] sm:$0xf]
  %v25 = vld [vmem:[%s1 + $0x20] sm:$0xf]
  %v26 = vld [vmem:[%s1 + $0x24] sm:$0xf]
  %v27 = vld [vmem:[%s1 + $0x28] sm:$0xf]
  %v28 = vld [vmem:[%s1 + $0x2c] sm:$0xf]
  %v29 = vld [vmem:[%s1 + $0x30] sm:$0xf]
  %v30 = vld [vmem:[%s1 + $0x34] sm:$0xf]
  %v31 = vld [vmem:[%s1 + $0x38] sm:$0xf]
  %v32 = vld [vmem:[%s1 + $0x3c] sm:$0xf]
  %v33 = vld [vmem:[%s2] sm:$0x1]
  %v34 = vlaneseq
  %v35 = vshrl.u32 %v34, 7
  %v36 = vsub.s32 0, %v35
  %v37 = vrot.slane %v33, %v36
  %v40 = vunpack.c.l.b16 %v15
  %v41 = vunpack.c.l.b16 %v16
  %v42 = vpack.c.b16 %v41, %v40
  %v60 = vunpack.c.l.b16 %v17
  %v61 = vunpack.c.l.b16 %v18
  %v62 = vunpack.c.l.b16 %v19
  %v63 = vunpack.c.l.b16 %v20
  %v64 = vunpack.c.l.b16 %v21
  %v65 = vunpack.c.l.b16 %v22
  %v66 = vunpack.c.l.b16 %v23
  %v67 = vunpack.c.l.b16 %v24
  %v68 = vunpack.c.l.b16 %v25
  %v69 = vunpack.c.l.b16 %v26
  %v70 = vunpack.c.l.b16 %v27
  %v71 = vunpack.c.l.b16 %v28
  %v72 = vunpack.c.l.b16 %v29
  %v73 = vunpack.c.l.b16 %v30
  %v74 = vunpack.c.l.b16 %v31
  %v75 = vunpack.c.l.b16 %v32
  %v76 = vpack.c.b16 %v61, %v60
  %v77 = vpack.c.b16 %v63, %v62
  %v78 = vpack.c.b16 %v65, %v64
  %v79 = vpack.c.b16 %v67, %v66
  %v80 = vpack.c.b16 %v69, %v68
  %v81 = vpack.c.b16 %v71, %v70
  %v82 = vpack.c.b16 %v73, %v72
  %v83 = vpack.c.b16 %v75, %v74
  %92 = vmatprep.subr.bf16.mxu0 0
  %93 = vmatpush1.bf16.msra.mxu0 %v76
  %94 = vmatprep.subr.bf16.mxu0 0
  %95 = vmatpush1.bf16.msra.mxu0 %v77
  %96 = vmatprep.subr.bf16.mxu0 0
  %97 = vmatpush1.bf16.msra.mxu0 %v78
  %98 = vmatprep.subr.bf16.mxu0 0
  %99 = vmatpush1.bf16.msra.mxu0 %v79
  %100 = vmatprep.subr.bf16.mxu0 0
  %101 = vmatpush1.bf16.msra.mxu0 %v80
  %102 = vmatprep.subr.bf16.mxu0 0
  %103 = vmatpush1.bf16.msra.mxu0 %v81
  %104 = vmatprep.subr.bf16.mxu0 0
  %105 = vmatpush1.bf16.msra.mxu0 %v82
  %106 = vmatprep.subr.bf16.mxu0 0
  %107 = vmatpush1.bf16.msra.mxu0 %v83
  %108 = vmatprep.subr.bf16.mxu0 0
  %109 = vmatpush1.bf16.msra.mxu0 0
  %110 = vmatprep.subr.bf16.mxu0 0
  %111 = vmatpush1.bf16.msra.mxu0 0
  %112 = vmatprep.subr.bf16.mxu0 0
  %113 = vmatpush1.bf16.msra.mxu0 0
  %114 = vmatprep.subr.bf16.mxu0 0
  %115 = vmatpush1.bf16.msra.mxu0 0
  %116 = vmatprep.subr.bf16.mxu0 0
  %117 = vmatpush1.bf16.msra.mxu0 0
  %118 = vmatprep.subr.bf16.mxu0 0
  %119 = vmatpush1.bf16.msra.mxu0 0
  %120 = vmatprep.subr.bf16.mxu0 0
  %121 = vmatpush1.bf16.msra.mxu0 0
  %122 = vmatprep.subr.bf16.mxu0 0
  %123 = vmatpush1.bf16.msra.mxu0 0
  %124 = vmatprep.mubr.bf16.mxu0 0
  %125 = vmatmul.mubr.bf16.gmra.mrb[0].mxu0 %v42
  %v126 = vpop.f32.mrb[0].mxu0
  %v127 = vadd.f32 %v37, %v126
  %v128 = vpop.f32.mrb[0].mxu0
  %v129 = vpop.f32.mrb[0].mxu0
  %v130 = vadd.f32 %v37, %v129
  %v131 = vpop.f32.mrb[0].mxu0
  %132 = vdwg.mxu0
  %v133 = vmax.f32 %v127, 0.0
  %v134 = vmax.f32 %v130, 0.0
  %v135 = vpack.c.bf16 %v134, %v133
  %s136 = scalar_lea.vmem %s1, 64
  %v137 = vld [vmem:[%s136] sm:$0xf]
  %v138 = vld [vmem:[%s136 + $0x4] sm:$0xf]
  %v139 = vld [vmem:[%s136 + $0x8] sm:$0xf]
  %v140 = vld [vmem:[%s136 + $0xc] sm:$0xf]
  %v141 = vld [vmem:[%s136 + $0x10] sm:$0xf]
  %v142 = vld [vmem:[%s136 + $0x14] sm:$0xf]
  %v143 = vld [vmem:[%s136 + $0x18] sm:$0xf]
  %v144 = vld [vmem:[%s136 + $0x1c] sm:$0xf]
  %v145 = vld [vmem:[%s136 + $0x20] sm:$0xf]
  %v146 = vld [vmem:[%s136 + $0x24] sm:$0xf]
  %v147 = vld [vmem:[%s136 + $0x28] sm:$0xf]
  %v148 = vld [vmem:[%s136 + $0x2c] sm:$0xf]
  %v149 = vld [vmem:[%s136 + $0x30] sm:$0xf]
  %v150 = vld [vmem:[%s136 + $0x34] sm:$0xf]
  %v151 = vld [vmem:[%s136 + $0x38] sm:$0xf]
  %v152 = vld [vmem:[%s136 + $0x3c] sm:$0xf]
  %v153 = vld [vmem:[%s2 + $0x1] sm:$0x1]
  %v154 = vlaneseq
  %v155 = vshrl.u32 %v154, 7
  %v156 = vsub.s32 0, %v155
  %v157 = vrot.slane %v153, %v156
  %v174 = vunpack.c.l.b16 %v137
  %v175 = vunpack.c.l.b16 %v138
  %v176 = vunpack.c.l.b16 %v139
  %v177 = vunpack.c.l.b16 %v140
  %v178 = vunpack.c.l.b16 %v141
  %v179 = vunpack.c.l.b16 %v142
  %v180 = vunpack.c.l.b16 %v143
  %v181 = vunpack.c.l.b16 %v144
  %v182 = vunpack.c.l.b16 %v145
  %v183 = vunpack.c.l.b16 %v146
  %v184 = vunpack.c.l.b16 %v147
  %v185 = vunpack.c.l.b16 %v148
  %v186 = vunpack.c.l.b16 %v149
  %v187 = vunpack.c.l.b16 %v150
  %v188 = vunpack.c.l.b16 %v151
  %v189 = vunpack.c.l.b16 %v152
  %v190 = vpack.c.b16 %v175, %v174
  %v191 = vpack.c.b16 %v177, %v176
  %v192 = vpack.c.b16 %v179, %v178
  %v193 = vpack.c.b16 %v181, %v180
  %v194 = vpack.c.b16 %v183, %v182
  %v195 = vpack.c.b16 %v185, %v184
  %v196 = vpack.c.b16 %v187, %v186
  %v197 = vpack.c.b16 %v189, %v188
  %206 = vmatprep.subr.bf16.mxu0 0
  %207 = vmatpush1.bf16.msra.mxu0 %v190
  %208 = vmatprep.subr.bf16.mxu0 0
  %209 = vmatpush1.bf16.msra.mxu0 %v191
  %210 = vmatprep.subr.bf16.mxu0 0
  %211 = vmatpush1.bf16.msra.mxu0 %v192
  %212 = vmatprep.subr.bf16.mxu0 0
  %213 = vmatpush1.bf16.msra.mxu0 %v193
  %214 = vmatprep.subr.bf16.mxu0 0
  %215 = vmatpush1.bf16.msra.mxu0 %v194
  %216 = vmatprep.subr.bf16.mxu0 0
  %217 = vmatpush1.bf16.msra.mxu0 %v195
  %218 = vmatprep.subr.bf16.mxu0 0
  %219 = vmatpush1.bf16.msra.mxu0 %v196
  %220 = vmatprep.subr.bf16.mxu0 0
  %221 = vmatpush1.bf16.msra.mxu0 %v197
  %222 = vmatprep.subr.bf16.mxu0 0
  %223 = vmatpush1.bf16.msra.mxu0 0
  %224 = vmatprep.subr.bf16.mxu0 0
  %225 = vmatpush1.bf16.msra.mxu0 0
  %226 = vmatprep.subr.bf16.mxu0 0
  %227 = vmatpush1.bf16.msra.mxu0 0
  %228 = vmatprep.subr.bf16.mxu0 0
  %229 = vmatpush1.bf16.msra.mxu0 0
  %230 = vmatprep.subr.bf16.mxu0 0
  %231 = vmatpush1.bf16.msra.mxu0 0
  %232 = vmatprep.subr.bf16.mxu0 0
  %233 = vmatpush1.bf16.msra.mxu0 0
  %234 = vmatprep.subr.bf16.mxu0 0
  %235 = vmatpush1.bf16.msra.mxu0 0
  %236 = vmatprep.subr.bf16.mxu0 0
  %237 = vmatpush1.bf16.msra.mxu0 0
  %238 = vmatprep.mubr.bf16.mxu0 0
  %239 = vmatmul.mubr.bf16.gmra.mrb[0].mxu0 %v135
  %v240 = vpop.f32.mrb[0].mxu0
  %v241 = vadd.f32 %v157, %v240
  %v242 = vpop.f32.mrb[0].mxu0
  %v243 = vpop.f32.mrb[0].mxu0
  %v244 = vadd.f32 %v157, %v243
  %v245 = vpop.f32.mrb[0].mxu0
  %246 = vdwg.mxu0
  %v247 = vmax.f32 %v241, 0.0
  %v248 = vmax.f32 %v244, 0.0
  %v249 = vpack.c.bf16 %v248, %v247
  %s250 = scalar_lea.vmem %s1, 128
  %v251 = vld [vmem:[%s250] sm:$0xf]
  %v252 = vld [vmem:[%s250 + $0x4] sm:$0xf]
  %v253 = vld [vmem:[%s250 + $0x8] sm:$0xf]
  %v254 = vld [vmem:[%s250 + $0xc] sm:$0xf]
  %v255 = vld [vmem:[%s250 + $0x10] sm:$0xf]
  %v256 = vld [vmem:[%s250 + $0x14] sm:$0xf]
  %v257 = vld [vmem:[%s250 + $0x18] sm:$0xf]
  %v258 = vld [vmem:[%s250 + $0x1c] sm:$0xf]
  %v259 = vld [vmem:[%s250 + $0x20] sm:$0xf]
  %v260 = vld [vmem:[%s250 + $0x24] sm:$0xf]
  %v261 = vld [vmem:[%s250 + $0x28] sm:$0xf]
  %v262 = vld [vmem:[%s250 + $0x2c] sm:$0xf]
  %v263 = vld [vmem:[%s250 + $0x30] sm:$0xf]
  %v264 = vld [vmem:[%s250 + $0x34] sm:$0xf]
  %v265 = vld [vmem:[%s250 + $0x38] sm:$0xf]
  %v266 = vld [vmem:[%s250 + $0x3c] sm:$0xf]
  %v267 = vld [vmem:[%s2 + $0x2] sm:$0x1]
  %v268 = vlaneseq
  %v269 = vshrl.u32 %v268, 7
  %v270 = vsub.s32 0, %v269
  %v271 = vrot.slane %v267, %v270
  %v288 = vunpack.c.l.b16 %v251
  %v289 = vunpack.c.l.b16 %v252
  %v290 = vunpack.c.l.b16 %v253
  %v291 = vunpack.c.l.b16 %v254
  %v292 = vunpack.c.l.b16 %v255
  %v293 = vunpack.c.l.b16 %v256
  %v294 = vunpack.c.l.b16 %v257
  %v295 = vunpack.c.l.b16 %v258
  %v296 = vunpack.c.l.b16 %v259
  %v297 = vunpack.c.l.b16 %v260
  %v298 = vunpack.c.l.b16 %v261
  %v299 = vunpack.c.l.b16 %v262
  %v300 = vunpack.c.l.b16 %v263
  %v301 = vunpack.c.l.b16 %v264
  %v302 = vunpack.c.l.b16 %v265
  %v303 = vunpack.c.l.b16 %v266
  %v304 = vpack.c.b16 %v289, %v288
  %v305 = vpack.c.b16 %v291, %v290
  %v306 = vpack.c.b16 %v293, %v292
  %v307 = vpack.c.b16 %v295, %v294
  %v308 = vpack.c.b16 %v297, %v296
  %v309 = vpack.c.b16 %v299, %v298
  %v310 = vpack.c.b16 %v301, %v300
  %v311 = vpack.c.b16 %v303, %v302
  %320 = vmatprep.subr.bf16.mxu0 0
  %321 = vmatpush1.bf16.msra.mxu0 %v304
  %322 = vmatprep.subr.bf16.mxu0 0
  %323 = vmatpush1.bf16.msra.mxu0 %v305
  %324 = vmatprep.subr.bf16.mxu0 0
  %325 = vmatpush1.bf16.msra.mxu0 %v306
  %326 = vmatprep.subr.bf16.mxu0 0
  %327 = vmatpush1.bf16.msra.mxu0 %v307
  %328 = vmatprep.subr.bf16.mxu0 0
  %329 = vmatpush1.bf16.msra.mxu0 %v308
  %330 = vmatprep.subr.bf16.mxu0 0
  %331 = vmatpush1.bf16.msra.mxu0 %v309
  %332 = vmatprep.subr.bf16.mxu0 0
  %333 = vmatpush1.bf16.msra.mxu0 %v310
  %334 = vmatprep.subr.bf16.mxu0 0
  %335 = vmatpush1.bf16.msra.mxu0 %v311
  %336 = vmatprep.subr.bf16.mxu0 0
  %337 = vmatpush1.bf16.msra.mxu0 0
  %338 = vmatprep.subr.bf16.mxu0 0
  %339 = vmatpush1.bf16.msra.mxu0 0
  %340 = vmatprep.subr.bf16.mxu0 0
  %341 = vmatpush1.bf16.msra.mxu0 0
  %342 = vmatprep.subr.bf16.mxu0 0
  %343 = vmatpush1.bf16.msra.mxu0 0
  %344 = vmatprep.subr.bf16.mxu0 0
  %345 = vmatpush1.bf16.msra.mxu0 0
  %346 = vmatprep.subr.bf16.mxu0 0
  %347 = vmatpush1.bf16.msra.mxu0 0
  %348 = vmatprep.subr.bf16.mxu0 0
  %349 = vmatpush1.bf16.msra.mxu0 0
  %350 = vmatprep.subr.bf16.mxu0 0
  %351 = vmatpush1.bf16.msra.mxu0 0
  %352 = vmatprep.mubr.bf16.mxu0 0
  %353 = vmatmul.mubr.bf16.gmra.mrb[0].mxu0 %v249
  %v354 = vpop.f32.mrb[0].mxu0
  %v355 = vadd.f32 %v271, %v354
  %v356 = vpop.f32.mrb[0].mxu0
  %v357 = vpop.f32.mrb[0].mxu0
  %v358 = vadd.f32 %v271, %v357
  %v359 = vpop.f32.mrb[0].mxu0
  %360 = vdwg.mxu0
  %v361 = vmax.f32 %v355, 0.0
  %v362 = vmax.f32 %v358, 0.0
  %v363 = vpack.c.bf16 %v362, %v361
  %s364 = scalar_lea.vmem %s1, 192
  %v365 = vld [vmem:[%s364] sm:$0xf]
  %v366 = vld [vmem:[%s364 + $0x4] sm:$0xf]
  %v367 = vld [vmem:[%s364 + $0x8] sm:$0xf]
  %v368 = vld [vmem:[%s364 + $0xc] sm:$0xf]
  %v369 = vld [vmem:[%s364 + $0x10] sm:$0xf]
  %v370 = vld [vmem:[%s364 + $0x14] sm:$0xf]
  %v371 = vld [vmem:[%s364 + $0x18] sm:$0xf]
  %v372 = vld [vmem:[%s364 + $0x1c] sm:$0xf]
  %v373 = vld [vmem:[%s364 + $0x20] sm:$0xf]
  %v374 = vld [vmem:[%s364 + $0x24] sm:$0xf]
  %v375 = vld [vmem:[%s364 + $0x28] sm:$0xf]
  %v376 = vld [vmem:[%s364 + $0x2c] sm:$0xf]
  %v377 = vld [vmem:[%s364 + $0x30] sm:$0xf]
  %v378 = vld [vmem:[%s364 + $0x34] sm:$0xf]
  %v379 = vld [vmem:[%s364 + $0x38] sm:$0xf]
  %v380 = vld [vmem:[%s364 + $0x3c] sm:$0xf]
  %v381 = vld [vmem:[%s2 + $0x3] sm:$0x1]
  %v382 = vlaneseq
  %v383 = vshrl.u32 %v382, 7
  %v384 = vsub.s32 0, %v383
  %v385 = vrot.slane %v381, %v384
  %v402 = vunpack.c.l.b16 %v365
  %v403 = vunpack.c.l.b16 %v366
  %v404 = vunpack.c.l.b16 %v367
  %v405 = vunpack.c.l.b16 %v368
  %v406 = vunpack.c.l.b16 %v369
  %v407 = vunpack.c.l.b16 %v370
  %v408 = vunpack.c.l.b16 %v371
  %v409 = vunpack.c.l.b16 %v372
  %v410 = vunpack.c.l.b16 %v373
  %v411 = vunpack.c.l.b16 %v374
  %v412 = vunpack.c.l.b16 %v375
  %v413 = vunpack.c.l.b16 %v376
  %v414 = vunpack.c.l.b16 %v377
  %v415 = vunpack.c.l.b16 %v378
  %v416 = vunpack.c.l.b16 %v379
  %v417 = vunpack.c.l.b16 %v380
  %v418 = vpack.c.b16 %v403, %v402
  %v419 = vpack.c.b16 %v405, %v404
  %v420 = vpack.c.b16 %v407, %v406
  %v421 = vpack.c.b16 %v409, %v408
  %v422 = vpack.c.b16 %v411, %v410
  %v423 = vpack.c.b16 %v413, %v412
  %v424 = vpack.c.b16 %v415, %v414
  %v425 = vpack.c.b16 %v417, %v416
  %434 = vmatprep.subr.bf16.mxu0 0
  %435 = vmatpush1.bf16.msra.mxu0 %v418
  %436 = vmatprep.subr.bf16.mxu0 0
  %437 = vmatpush1.bf16.msra.mxu0 %v419
  %438 = vmatprep.subr.bf16.mxu0 0
  %439 = vmatpush1.bf16.msra.mxu0 %v420
  %440 = vmatprep.subr.bf16.mxu0 0
  %441 = vmatpush1.bf16.msra.mxu0 %v421
  %442 = vmatprep.subr.bf16.mxu0 0
  %443 = vmatpush1.bf16.msra.mxu0 %v422
  %444 = vmatprep.subr.bf16.mxu0 0
  %445 = vmatpush1.bf16.msra.mxu0 %v423
  %446 = vmatprep.subr.bf16.mxu0 0
  %447 = vmatpush1.bf16.msra.mxu0 %v424
  %448 = vmatprep.subr.bf16.mxu0 0
  %449 = vmatpush1.bf16.msra.mxu0 %v425
  %450 = vmatprep.subr.bf16.mxu0 0
  %451 = vmatpush1.bf16.msra.mxu0 0
  %452 = vmatprep.subr.bf16.mxu0 0
  %453 = vmatpush1.bf16.msra.mxu0 0
  %454 = vmatprep.subr.bf16.mxu0 0
  %455 = vmatpush1.bf16.msra.mxu0 0
  %456 = vmatprep.subr.bf16.mxu0 0
  %457 = vmatpush1.bf16.msra.mxu0 0
  %458 = vmatprep.subr.bf16.mxu0 0
  %459 = vmatpush1.bf16.msra.mxu0 0
  %460 = vmatprep.subr.bf16.mxu0 0
  %461 = vmatpush1.bf16.msra.mxu0 0
  %462 = vmatprep.subr.bf16.mxu0 0
  %463 = vmatpush1.bf16.msra.mxu0 0
  %464 = vmatprep.subr.bf16.mxu0 0
  %465 = vmatpush1.bf16.msra.mxu0 0
  %466 = vmatprep.mubr.bf16.mxu0 0
  %467 = vmatmul.mubr.bf16.gmra.mrb[0].mxu0 %v363
  %v468 = vpop.f32.mrb[0].mxu0
  %v469 = vadd.f32 %v385, %v468
  %v470 = vpop.f32.mrb[0].mxu0
  %v471 = vpop.f32.mrb[0].mxu0
  %v472 = vadd.f32 %v385, %v471
  %v473 = vpop.f32.mrb[0].mxu0
  %474 = vdwg.mxu0
  %v475 = vxor.u32 %v469, 2147483648
  %v476 = vxor.u32 %v472, 2147483648
  %v477 = vmul.f32 %v475, 1.442695
  %v478 = vpow.pop %v477
  %v479 = vmul.f32 %v476, 1.442695
  %v480 = vpow.pop %v479
  %v481 = vadd.f32 %v478, 1.0
  %v482 = vadd.f32 %v480, 1.0
  %v483 = vrcp.pop %v481
  %v484 = vmul.f32 1.0, %v483
  %v485 = vrcp.pop %v482
  %v486 = vmul.f32 1.0, %v485
  %487 = vst [vmem:[%s3] sm:$0xff] %v484
  %488 = vst [vmem:[%s3 + $0x8] sm:$0xff] %v486
  // Predicated region
  $region14: #{distance_net_forward.1} parent=0 // pred_check
    _
  $region15: #{distance_net_forward.1} parent=0 // pred_check_branch
    %490 = sbr.rel (0) target = $region17
  $region16: #{distance_net_forward.1} parent=0 // pred_region
    _
  $region17: #{distance_net_forward.1} parent=0 // pred_fallthru
    _
  // Predicated region
  $region18: #{distance_net_forward.1} parent=0 // pred_check
    _
  $region19: #{distance_net_forward.1} parent=0 // pred_check_branch
    %492 = sbr.rel (0) target = $region21
  $region20: #{distance_net_forward.1} parent=0 // pred_region
    _
  $region21: #{distance_net_forward.1} parent=0 // pred_fallthru
    _

</llo_original>
